<compile_context>
chip_gen: v6e
topology: v6e:2x2x1
jax: 0.10.0
libtpu: 0.0.40
codegen_flags: <defaults>
</compile_context>

<pallas_src>
import functools

import jax
import jax.numpy as jnp
from jax.experimental import pallas as pl
from jax.experimental.pallas import tpu as pltpu


def adanorm_kernel(x_ref, y_ref, w_ref, b_ref, rw_ref, rb_ref, o_ref, mod_sc,
                   *, eps):
    # x_ref : (1, ts, D)    one batch element, one sequence tile
    # y_ref : (1, 1, Y)     conditioning vector for this batch element
    # w_ref : (Y, 2D)       mlp Linear weight, pre-transposed to (in, out)
    # b_ref : (1, 2D)       mlp Linear bias
    # rw_ref: (1, D)        RMSNorm weight
    # rb_ref: (1, D)        RMSNorm bias
    # mod_sc: (1, 2D) f32   scratch: [shift | scale] for the current batch element
    D = o_ref.shape[-1]

    # shift/scale depend only on the batch index -> compute once per batch element
    # (first sequence tile) and keep resident in VMEM scratch.
    @pl.when(pl.program_id(1) == 0)
    def _():
        y = y_ref[0].astype(jnp.float32)                      # (1, Y)
        sy = y * jax.nn.sigmoid(y)                            # SiLU
        mod_sc[...] = (
            jnp.dot(sy, w_ref[...].astype(jnp.float32),
                    preferred_element_type=jnp.float32)
            + b_ref[...].astype(jnp.float32))                 # (1, 2D)

    mod = mod_sc[...]                                         # (1, 2D)
    shift = mod[:, :D][:, None, :]                            # (1, 1, D)
    scale = mod[:, D:][:, None, :]                            # (1, 1, D)

    # RMSNorm in fp32 (matches torch: _norm(x.float()).type_as(x), then affine).
    x = x_ref[...]                                            # (1, ts, D)
    xf = x.astype(jnp.float32)
    ms = jnp.mean(xf * xf, axis=-1, keepdims=True)            # (1, ts, 1)
    xn = (xf * jax.lax.rsqrt(ms + eps)).astype(x.dtype)
    xn = rw_ref[...][:, None, :] * xn + rb_ref[...][:, None, :]

    out = xn.astype(jnp.float32) * (1.0 + scale) + shift
    o_ref[...] = out.astype(o_ref.dtype)


def _choose_seq_tile(S):
    # Big lane-dense tiles (up to 512 rows); keep a multiple of 8 sublanes.
    ts = min(512, S)
    return ((ts + 7) // 8) * 8


@functools.partial(jax.jit, static_argnames=("eps",))
def ada_norm(x, y, w_mlp, b_mlp, rms_w, rms_b, *, eps=1e-5):
    """x: (B, S, D); y: (B, Y); w_mlp: (2D, Y) torch-layout; b_mlp: (2D,)."""
    B, S, D = x.shape
    Y = y.shape[-1]
    assert w_mlp.shape == (2 * D, Y)

    ts = _choose_seq_tile(S)
    S_pad = ((S + ts - 1) // ts) * ts
    x_p = jnp.pad(x, ((0, 0), (0, S_pad - S), (0, 0))) if S_pad != S else x

    w_t = w_mlp.T                          # (Y, 2D): kernel does silu(y) @ w_t
    b2 = b_mlp.reshape(1, 2 * D)
    y3 = y.reshape(B, 1, Y)
    rw = rms_w.reshape(1, D)
    rb = rms_b.reshape(1, D)

    itemsize = x.dtype.itemsize
    bytes_accessed = int(
        (x_p.size + B * S_pad * D) * itemsize         # x in, out
        + (B * Y + Y * 2 * D + 2 * D + 2 * D) * 4)    # y + params
    cost = pl.CostEstimate(
        flops=int(2 * B * Y * 2 * D + 8 * B * S_pad * D),
        transcendentals=int(B * Y + B * S_pad),
        bytes_accessed=bytes_accessed)

    out = pl.pallas_call(
        functools.partial(adanorm_kernel, eps=eps),
        out_shape=jax.ShapeDtypeStruct((B, S_pad, D), x.dtype),
        grid_spec=pltpu.PrefetchScalarGridSpec(
            num_scalar_prefetch=0,
            grid=(B, S_pad // ts),
            in_specs=[
                pl.BlockSpec((1, ts, D), lambda b, s: (b, s, 0)),   # x tile
                pl.BlockSpec((1, 1, Y), lambda b, s: (b, 0, 0)),    # y row
                pl.BlockSpec((Y, 2 * D), lambda b, s: (0, 0)),      # mlp W^T (full)
                pl.BlockSpec((1, 2 * D), lambda b, s: (0, 0)),      # mlp bias
                pl.BlockSpec((1, D), lambda b, s: (0, 0)),          # rms weight
                pl.BlockSpec((1, D), lambda b, s: (0, 0)),          # rms bias
            ],
            out_specs=pl.BlockSpec((1, ts, D), lambda b, s: (b, s, 0)),
            scratch_shapes=[pltpu.VMEM((1, 2 * D), jnp.float32)],
        ),
        compiler_params=pltpu.CompilerParams(
            dimension_semantics=("parallel", "arbitrary")),
        cost_estimate=cost,
    )(x_p, y3, w_t, b2, rw, rb)

    if S_pad != S:
        out = out[:, :S, :]
    return out


if __name__ == "__main__":
    key = jax.random.PRNGKey(0)
    B, S, D, Y = 2, 8, 128, 32   # x_dim=128, y_dim=32

    kx, ky, kw, kb = jax.random.split(key, 4)
    x = jax.random.normal(kx, (B, S, D), jnp.float32)
    y = jax.random.normal(ky, (B, Y), jnp.float32)
    # nn.Linear(y_dim, 2*x_dim) default-style init, weight shape (out, in)
    w_mlp = jax.random.uniform(kw, (2 * D, Y), jnp.float32, -1.0, 1.0) / jnp.sqrt(Y)
    b_mlp = jax.random.uniform(kb, (2 * D,), jnp.float32, -1.0, 1.0) / jnp.sqrt(Y)
    # RMSNorm(linear=True, bias=True) init
    rms_w = jnp.ones((D,), jnp.float32)
    rms_b = jnp.zeros((D,), jnp.float32)

    out = ada_norm(x, y, w_mlp, b_mlp, rms_w, rms_b)
    out = jax.block_until_ready(out)

    # plain-JAX reference reproducing the PyTorch forward
    def ref(x, y):
        xf = x.astype(jnp.float32)
        ms = jnp.mean(xf * xf, axis=-1, keepdims=True)
        xn = (xf * jax.lax.rsqrt(ms + 1e-5)).astype(x.dtype)
        xn = rms_w * xn + rms_b
        sy = y * jax.nn.sigmoid(y)
        mod = jnp.dot(sy, w_mlp.T, precision=jax.lax.Precision.HIGHEST) + b_mlp
        shift, scale = jnp.split(mod, 2, axis=-1)
        return xn * (1.0 + scale[:, None, :]) + shift[:, None, :]

    ref_out = ref(x, y)
    assert out.shape == (B, S, D)
    err = float(jnp.max(jnp.abs(out - ref_out)))
    assert jnp.allclose(out, ref_out, atol=1e-4, rtol=1e-4), err

    print("KERNEL_OK")
</pallas_src>

<mosaic_0001>
module attributes {stable_mosaic.version = 11 : i64} {
  func.func @adanorm_kernel(%arg0: i32, %arg1: i32, %arg2: memref<1x8x128xf32, #tpu.memory_space<vmem>>, %arg3: memref<1x1x32xf32, #tpu.memory_space<vmem>>, %arg4: memref<32x256xf32, #tpu.memory_space<vmem>>, %arg5: memref<1x256xf32, #tpu.memory_space<vmem>>, %arg6: memref<1x128xf32, #tpu.memory_space<vmem>>, %arg7: memref<1x128xf32, #tpu.memory_space<vmem>>, %arg8: memref<1x8x128xf32, #tpu.memory_space<vmem>>, %arg9: memref<1x256xf32, #tpu.memory_space<vmem>>) attributes {dimension_semantics = [#tpu.dimension_semantics<parallel>, #tpu.dimension_semantics<arbitrary>], iteration_bounds = array<i64: 2, 1>, scalar_prefetch = 0 : i64, scratch_operands = 1 : i64, tpu.core_type = #tpu.core_type<tc>, window_params = [{transform_indices = @transform_0, window_bounds = array<i64: 1, 8, 128>}, {transform_indices = @transform_1, window_bounds = array<i64: 1, 1, 32>}, {pipeline_mode = #tpu.pipeline_mode<synchronous>, transform_indices = @transform_2, window_bounds = array<i64: 32, 256>}, {pipeline_mode = #tpu.pipeline_mode<synchronous>, transform_indices = @transform_3, window_bounds = array<i64: 1, 256>}, {pipeline_mode = #tpu.pipeline_mode<synchronous>, transform_indices = @transform_4, window_bounds = array<i64: 1, 128>}, {pipeline_mode = #tpu.pipeline_mode<synchronous>, transform_indices = @transform_5, window_bounds = array<i64: 1, 128>}, {transform_indices = @transform_6, window_bounds = array<i64: 1, 8, 128>}]} {
    %c0_i32 = arith.constant 0 : i32
    %0 = arith.cmpi eq, %arg1, %c0_i32 : i32
    %1 = arith.extui %0 : i1 to i32
    %c0_i32_0 = arith.constant 0 : i32
    %2 = arith.cmpi ne, %1, %c0_i32_0 : i32
    scf.if %2 {
      %c0_15 = arith.constant 0 : index
      %c0_16 = arith.constant 0 : index
      %c0_17 = arith.constant 0 : index
      %34 = vector.load %arg3[%c0_15, %c0_16, %c0_17] : memref<1x1x32xf32, #tpu.memory_space<vmem>>, vector<1x1x32xf32>
      %35 = vector.shape_cast %34 : vector<1x1x32xf32> to vector<1x32xf32>
      %36 = arith.negf %35 : vector<1x32xf32>
      %37 = math.exp %36 : vector<1x32xf32>
      %cst_18 = arith.constant 1.000000e+00 : f32
      %38 = vector.broadcast %cst_18 : f32 to vector<1x32xf32>
      %39 = arith.addf %38, %37 : vector<1x32xf32>
      %40 = arith.divf %38, %39 : vector<1x32xf32>
      %41 = arith.mulf %35, %40 : vector<1x32xf32>
      %c0_19 = arith.constant 0 : index
      %c0_20 = arith.constant 0 : index
      %42 = vector.load %arg4[%c0_19, %c0_20] : memref<32x256xf32, #tpu.memory_space<vmem>>, vector<32x256xf32>
      %cst_21 = arith.constant dense<0.000000e+00> : vector<1x256xf32>
      %43 = tpu.matmul %41, %42, %cst_21 {dimension_numbers = #tpu.dot_dimension_numbers<[1], [0], [0], [1], [0, 0, 1, 1], [], []>} : vector<1x32xf32>, vector<32x256xf32>, vector<1x256xf32> -> vector<1x256xf32>
      %c0_22 = arith.constant 0 : index
      %c0_23 = arith.constant 0 : index
      %44 = vector.load %arg5[%c0_22, %c0_23] : memref<1x256xf32, #tpu.memory_space<vmem>>, vector<1x256xf32>
      %45 = arith.addf %43, %44 : vector<1x256xf32>
      %c0_24 = arith.constant 0 : index
      %c0_25 = arith.constant 0 : index
      %46 = vector.load %arg9[%c0_24, %c0_25] : memref<1x256xf32, #tpu.memory_space<vmem>>, vector<1x256xf32>
      tpu.vector_store %arg9[%c0_24, %c0_25], %45 {strides = array<i32>} : memref<1x256xf32, #tpu.memory_space<vmem>>, vector<1x256xf32>,
    } else {
    }
    %c0 = arith.constant 0 : index
    %c0_1 = arith.constant 0 : index
    %3 = vector.load %arg9[%c0, %c0_1] : memref<1x256xf32, #tpu.memory_space<vmem>>, vector<1x256xf32>
    %4 = vector.extract_strided_slice %3 {offsets = [0, 0], sizes = [1, 128], strides = [1, 1]} : vector<1x256xf32> to vector<1x128xf32>
    %5 = vector.shape_cast %4 : vector<1x128xf32> to vector<1x1x128xf32>
    %6 = vector.extract_strided_slice %3 {offsets = [0, 128], sizes = [1, 128], strides = [1, 1]} : vector<1x256xf32> to vector<1x128xf32>
    %7 = vector.shape_cast %6 : vector<1x128xf32> to vector<1x1x128xf32>
    %c0_2 = arith.constant 0 : index
    %c0_3 = arith.constant 0 : index
    %c0_4 = arith.constant 0 : index
    %8 = vector.load %arg2[%c0_2, %c0_3, %c0_4] : memref<1x8x128xf32, #tpu.memory_space<vmem>>, vector<1x8x128xf32>
    %9 = arith.mulf %8, %8 : vector<1x8x128xf32>
    %cst = arith.constant dense<0.000000e+00> : vector<1x8xf32>
    %10 = vector.multi_reduction <add>, %9, %cst [2] : vector<1x8x128xf32> to vector<1x8xf32>
    %11 = vector.shape_cast %10 : vector<1x8xf32> to vector<1x8x1xf32>
    %cst_5 = arith.constant 1.280000e+02 : f32
    %12 = vector.broadcast %cst_5 : f32 to vector<1x8x1xf32>
    %13 = arith.divf %11, %12 : vector<1x8x1xf32>
    %cst_6 = arith.constant 9.99999974E-6 : f32
    %14 = vector.broadcast %cst_6 : f32 to vector<1x8x1xf32>
    %15 = arith.addf %13, %14 : vector<1x8x1xf32>
    %16 = math.rsqrt %15 : vector<1x8x1xf32>
    %17 = vector.broadcast %16 : vector<1x8x1xf32> to vector<1x8x128xf32>
    %18 = arith.mulf %8, %17 : vector<1x8x128xf32>
    %c0_7 = arith.constant 0 : index
    %c0_8 = arith.constant 0 : index
    %19 = vector.load %arg6[%c0_7, %c0_8] : memref<1x128xf32, #tpu.memory_space<vmem>>, vector<1x128xf32>
    %20 = vector.shape_cast %19 : vector<1x128xf32> to vector<1x1x128xf32>
    %21 = vector.broadcast %20 : vector<1x1x128xf32> to vector<1x8x128xf32>
    %22 = arith.mulf %21, %18 : vector<1x8x128xf32>
    %c0_9 = arith.constant 0 : index
    %c0_10 = arith.constant 0 : index
    %23 = vector.load %arg7[%c0_9, %c0_10] : memref<1x128xf32, #tpu.memory_space<vmem>>, vector<1x128xf32>
    %24 = vector.shape_cast %23 : vector<1x128xf32> to vector<1x1x128xf32>
    %25 = vector.broadcast %24 : vector<1x1x128xf32> to vector<1x8x128xf32>
    %26 = arith.addf %22, %25 : vector<1x8x128xf32>
    %cst_11 = arith.constant 1.000000e+00 : f32
    %27 = vector.broadcast %cst_11 : f32 to vector<1x1x128xf32>
    %28 = arith.addf %27, %7 : vector<1x1x128xf32>
    %29 = vector.broadcast %28 : vector<1x1x128xf32> to vector<1x8x128xf32>
    %30 = arith.mulf %26, %29 : vector<1x8x128xf32>
    %31 = vector.broadcast %5 : vector<1x1x128xf32> to vector<1x8x128xf32>
    %32 = arith.addf %30, %31 : vector<1x8x128xf32>
    %c0_12 = arith.constant 0 : index
    %c0_13 = arith.constant 0 : index
    %c0_14 = arith.constant 0 : index
    %33 = vector.load %arg8[%c0_12, %c0_13, %c0_14] : memref<1x8x128xf32, #tpu.memory_space<vmem>>, vector<1x8x128xf32>
    tpu.vector_store %arg8[%c0_12, %c0_13, %c0_14], %32 {strides = array<i32>} : memref<1x8x128xf32, #tpu.memory_space<vmem>>, vector<1x8x128xf32>,
    return
  }
  func.func @transform_0(%arg0: i32, %arg1: i32) -> (i32, i32, i32) {
    %c0_i32 = arith.constant 0 : i32
    %c0_i32_0 = arith.constant 0 : i32
    return %arg0, %arg1, %c0_i32 : i32, i32, i32
  }
  func.func @transform_1(%arg0: i32, %arg1: i32) -> (i32, i32, i32) {
    %c0_i32 = arith.constant 0 : i32
    %c0_i32_0 = arith.constant 0 : i32
    %c0_i32_1 = arith.constant 0 : i32
    return %arg0, %c0_i32, %c0_i32_0 : i32, i32, i32
  }
  func.func @transform_2(%arg0: i32, %arg1: i32) -> (i32, i32) {
    %c0_i32 = arith.constant 0 : i32
    %c0_i32_0 = arith.constant 0 : i32
    %c0_i32_1 = arith.constant 0 : i32
    return %c0_i32, %c0_i32_0 : i32, i32
  }
  func.func @transform_3(%arg0: i32, %arg1: i32) -> (i32, i32) {
    %c0_i32 = arith.constant 0 : i32
    %c0_i32_0 = arith.constant 0 : i32
    %c0_i32_1 = arith.constant 0 : i32
    return %c0_i32, %c0_i32_0 : i32, i32
  }
  func.func @transform_4(%arg0: i32, %arg1: i32) -> (i32, i32) {
    %c0_i32 = arith.constant 0 : i32
    %c0_i32_0 = arith.constant 0 : i32
    %c0_i32_1 = arith.constant 0 : i32
    return %c0_i32, %c0_i32_0 : i32, i32
  }
  func.func @transform_5(%arg0: i32, %arg1: i32) -> (i32, i32) {
    %c0_i32 = arith.constant 0 : i32
    %c0_i32_0 = arith.constant 0 : i32
    %c0_i32_1 = arith.constant 0 : i32
    return %c0_i32, %c0_i32_0 : i32, i32
  }
  func.func @transform_6(%arg0: i32, %arg1: i32) -> (i32, i32, i32) {
    %c0_i32 = arith.constant 0 : i32
    %c0_i32_0 = arith.constant 0 : i32
    return %arg0, %arg1, %c0_i32 : i32, i32, i32
  }
}

</mosaic_0001>

<llo_original>
// kernel: ada_norm.1
$region0: #{ada_norm.1}
  #allocation0 [shape = 'u32[]', space=smem, size = 0x4, offset = 0x4, fixed_abs, tag = 'smem constant byte address 0x4 - core index']
  #allocation1 [shape = 'u32[144,128]{1,0:T(1,128)}', space=vmem, size = 0x12000, scoped, tag = 'internal scratch']
  #allocation2 [shape = 'f32[1,256]{1,0:T(1,128)}', space=vmem, size = 0x400, scoped, tag = 'scratch operand']
  %s0 = inlined_call_operand.hbm [shape: f32[2,8,128], index: 0, kind: input, shape index: {}]
  %s1 = inlined_call_operand.vmem [shape: f32[2,1,32], index: 1, kind: input, shape index: {}]
  %s2 = inlined_call_operand.hbm [shape: f32[32,256], index: 2, kind: input, shape index: {}]
  %s3 = inlined_call_operand.vmem [shape: f32[1,256], index: 3, kind: input, shape index: {}]
  %s4 = inlined_call_operand.vmem [shape: f32[1,128], index: 4, kind: input, shape index: {}]
  %s5 = inlined_call_operand.vmem [shape: f32[1,128], index: 5, kind: input, shape index: {}]
  %s6 = inlined_call_operand.hbm [shape: f32[2,8,128], index: 6, kind: output, shape index: {}]
  %s7 = sld [smem:[#allocation0]]
  $region69: #{ada_norm.1} parent=0
    _
  %s9 = ssub.s32 1, %s7
  %s10 = scalar_select 0, %s9, %s7
  $region1: #{ada_norm.1} parent=0
    #allocation3 [shape = 'u8[8192]{0}', space=vmem, size = 0x2000, scoped, tag = 'input window, operand 0']
    #allocation4 [shape = 's32[2]{0}', space=sflag, size = 0x8, scoped, tag = 'scoped memory for ada_norm.1']
    #allocation5 [shape = 's32[2]{0}', space=sflag, size = 0x8, scoped, tag = 'scoped memory for ada_norm.1']
    #allocation6 [shape = 'u8[32768]{0}', space=vmem, size = 0x8000, scoped, tag = 'input window, operand 2, single buffered']
    #allocation7 [shape = 's32[1]{0}', space=sflag, size = 0x4, scoped, tag = 'scoped memory for ada_norm.1']
    #allocation8 [shape = 'u8[8192]{0}', space=vmem, size = 0x2000, scoped, tag = 'output window, operand 0']
    %11 = vsyncpa [#allocation4], 0
    %s12 = scalar_lea.sflag [#allocation4], 1
    %13 = vsyncpa %s12, 0
    %14 = vsyncpa [#allocation7], 0
    %15 = vsyncpa [#allocation5], 0
    %s16 = scalar_lea.sflag [#allocation5], 1
    %17 = vsyncpa %s16, 0
    loop: start=0, step=1, limit=4
    $region2: #{ada_norm.1} parent=1 // loop_pre_header
      _
    $region3: #{ada_norm.1} parent=1 // loop_header
      %s19 = sphi 0, %s23
      %p20 = scmp.ge.s32.totalorder %s19, 4
      %s26 = sphi 0, %s38
      %s27 = sphi 0, %s34
      %s28 = sphi 0, %s26
      %s29 = sphi 0, %s27
      %s30 = sphi 0, %s28
      %s31 = sphi 0, %s29
      %s43 = sphi 0, %s45
      %s46 = sphi 0, %s43
      %s47 = sphi 0, %s46
      %s63 = sphi 0, %s47
      %s69 = sphi 0, %s71
      %s72 = sphi 0, %s69
      %s73 = sphi 0, %s72
      %s89 = sphi 0, %s73
      %s93 = sphi 0, %s93
      %s95 = sphi 0, %s93
      %s96 = sphi 0, %s95
      %s110 = sphi 0, %s96
      %s114 = sphi 0, %s114
      %s116 = sphi 0, %s114
      %s117 = sphi 0, %s116
      %s131 = sphi 0, %s117
      %s135 = sphi 0, %s135
      %s137 = sphi 0, %s135
      %s138 = sphi 0, %s137
      %s152 = sphi 0, %s138
      %s156 = sphi 0, %s156
      %s158 = sphi 0, %s156
      %s159 = sphi 0, %s158
      %s173 = sphi 0, %s159
      %s181 = sphi 0, %s183
      %s184 = sphi 0, %s181
      %s185 = sphi 0, %s184
      %s201 = sphi 0, %s185
    $region4: #{ada_norm.1} parent=1 // loop_header_branch
      %22 = sbr.rel (%p20) target = $region8
    $region5: #{ada_norm.1} parent=1 // loop_body
      %s24 = ssub.s32 %s19, 1
      %s25 = ssub.s32 %s19, 2
      %s32 = sadd.s32 1, %s27
      %p33 = scmp.ge.s32.totalorder %s32, 1
      %s34 = scalar_select %p33, 0, %s32
      %s35 = sadd.s32 1, %s26
      %s36 = scalar_select %p33, %s35, %s26
      %p37 = scmp.ge.s32.totalorder %s36, 2
      %s38 = scalar_select %p37, 0, %s36
      %s39 = ssub.s32 %s26, %s38
      %s40 = ssub.s32 %s27, %s34
      %s41 = sor.u32 %s39, %s40
      %p42 = scmp.eq.s32.totalorder %s41, 0
      %s44 = sadd.s32 %s43, 1
      %s45 = scalar_select %p42, %s43, %s44
      %p48 = pneg %p42
      %p49 = scmp.eq.s32.totalorder %s19, 1
      %p50 = por %p48, %p49
      %p51 = scmp.ne.s32.totalorder %s43, %s46
      %p52 = scmp.eq.s32.totalorder %s19, 0
      %p53 = por %p51, %p52
      %p54 = scmp.ne.s32.totalorder %s43, %s46
      %p55 = scmp.eq.s32.totalorder %s24, 1
      %p56 = por %p54, %p55
      %p57 = scmp.ne.s32.totalorder %s46, %s47
      %p58 = scmp.eq.s32.totalorder %s24, 0
      %p59 = por %p57, %p58
      %p60 = scmp.ne.s32.totalorder %s46, %s47
      %p61 = scmp.eq.s32.totalorder %s25, 1
      %p62 = por %p60, %p61
      %p64 = scmp.ne.s32.totalorder %s47, %s63
      %p65 = scmp.eq.s32.totalorder %s25, 0
      %p66 = por %p64, %p65
      %s67 = ssub.s32 %s26, %s38
      %p68 = scmp.eq.s32.totalorder %s67, 0
      %s70 = sadd.s32 %s69, 1
      %s71 = scalar_select %p68, %s69, %s70
      %p74 = pneg %p68
      %p75 = scmp.eq.s32.totalorder %s19, 1
      %p76 = por %p74, %p75
      %p77 = scmp.ne.s32.totalorder %s69, %s72
      %p78 = scmp.eq.s32.totalorder %s19, 0
      %p79 = por %p77, %p78
      %p80 = scmp.ne.s32.totalorder %s69, %s72
      %p81 = scmp.eq.s32.totalorder %s24, 1
      %p82 = por %p80, %p81
      %p83 = scmp.ne.s32.totalorder %s72, %s73
      %p84 = scmp.eq.s32.totalorder %s24, 0
      %p85 = por %p83, %p84
      %p86 = scmp.ne.s32.totalorder %s72, %s73
      %p87 = scmp.eq.s32.totalorder %s25, 1
      %p88 = por %p86, %p87
      %p90 = scmp.ne.s32.totalorder %s73, %s89
      %p91 = scmp.eq.s32.totalorder %s25, 0
      %p92 = por %p90, %p91
      %s94 = sadd.s32 %s93, 1
      %p97 = scmp.eq.s32.totalorder %s19, 1
      %p98 = scmp.ne.s32.totalorder %s93, %s95
      %p99 = scmp.eq.s32.totalorder %s19, 0
      %p100 = por %p98, %p99
      %p101 = scmp.ne.s32.totalorder %s93, %s95
      %p102 = scmp.eq.s32.totalorder %s24, 1
      %p103 = por %p101, %p102
      %p104 = scmp.ne.s32.totalorder %s95, %s96
      %p105 = scmp.eq.s32.totalorder %s24, 0
      %p106 = por %p104, %p105
      %p107 = scmp.ne.s32.totalorder %s95, %s96
      %p108 = scmp.eq.s32.totalorder %s25, 1
      %p109 = por %p107, %p108
      %p111 = scmp.ne.s32.totalorder %s96, %s110
      %p112 = scmp.eq.s32.totalorder %s25, 0
      %p113 = por %p111, %p112
      %s115 = sadd.s32 %s114, 1
      %p118 = scmp.eq.s32.totalorder %s19, 1
      %p119 = scmp.ne.s32.totalorder %s114, %s116
      %p120 = scmp.eq.s32.totalorder %s19, 0
      %p121 = por %p119, %p120
      %p122 = scmp.ne.s32.totalorder %s114, %s116
      %p123 = scmp.eq.s32.totalorder %s24, 1
      %p124 = por %p122, %p123
      %p125 = scmp.ne.s32.totalorder %s116, %s117
      %p126 = scmp.eq.s32.totalorder %s24, 0
      %p127 = por %p125, %p126
      %p128 = scmp.ne.s32.totalorder %s116, %s117
      %p129 = scmp.eq.s32.totalorder %s25, 1
      %p130 = por %p128, %p129
      %p132 = scmp.ne.s32.totalorder %s117, %s131
      %p133 = scmp.eq.s32.totalorder %s25, 0
      %p134 = por %p132, %p133
      %s136 = sadd.s32 %s135, 1
      %p139 = scmp.eq.s32.totalorder %s19, 1
      %p140 = scmp.ne.s32.totalorder %s135, %s137
      %p141 = scmp.eq.s32.totalorder %s19, 0
      %p142 = por %p140, %p141
      %p143 = scmp.ne.s32.totalorder %s135, %s137
      %p144 = scmp.eq.s32.totalorder %s24, 1
      %p145 = por %p143, %p144
      %p146 = scmp.ne.s32.totalorder %s137, %s138
      %p147 = scmp.eq.s32.totalorder %s24, 0
      %p148 = por %p146, %p147
      %p149 = scmp.ne.s32.totalorder %s137, %s138
      %p150 = scmp.eq.s32.totalorder %s25, 1
      %p151 = por %p149, %p150
      %p153 = scmp.ne.s32.totalorder %s138, %s152
      %p154 = scmp.eq.s32.totalorder %s25, 0
      %p155 = por %p153, %p154
      %s157 = sadd.s32 %s156, 1
      %p160 = scmp.eq.s32.totalorder %s19, 1
      %p161 = scmp.ne.s32.totalorder %s156, %s158
      %p162 = scmp.eq.s32.totalorder %s19, 0
      %p163 = por %p161, %p162
      %p164 = scmp.ne.s32.totalorder %s156, %s158
      %p165 = scmp.eq.s32.totalorder %s24, 1
      %p166 = por %p164, %p165
      %p167 = scmp.ne.s32.totalorder %s158, %s159
      %p168 = scmp.eq.s32.totalorder %s24, 0
      %p169 = por %p167, %p168
      %p170 = scmp.ne.s32.totalorder %s158, %s159
      %p171 = scmp.eq.s32.totalorder %s25, 1
      %p172 = por %p170, %p171
      %p174 = scmp.ne.s32.totalorder %s159, %s173
      %p175 = scmp.eq.s32.totalorder %s25, 0
      %p176 = por %p174, %p175
      %s177 = ssub.s32 %s26, %s38
      %s178 = ssub.s32 %s27, %s34
      %s179 = sor.u32 %s177, %s178
      %p180 = scmp.eq.s32.totalorder %s179, 0
      %s182 = sadd.s32 %s181, 1
      %s183 = scalar_select %p180, %s181, %s182
      %p186 = pneg %p180
      %p187 = scmp.eq.s32.totalorder %s19, 1
      %p188 = por %p186, %p187
      %p189 = scmp.ne.s32.totalorder %s181, %s184
      %p190 = scmp.eq.s32.totalorder %s19, 0
      %p191 = por %p189, %p190
      %p192 = scmp.ne.s32.totalorder %s181, %s184
      %p193 = scmp.eq.s32.totalorder %s24, 1
      %p194 = por %p192, %p193
      %p195 = scmp.ne.s32.totalorder %s184, %s185
      %p196 = scmp.eq.s32.totalorder %s24, 0
      %p197 = por %p195, %p196
      %p198 = scmp.ne.s32.totalorder %s184, %s185
      %p199 = scmp.eq.s32.totalorder %s25, 1
      %p200 = por %p198, %p199
      %p202 = scmp.ne.s32.totalorder %s185, %s201
      %p203 = scmp.eq.s32.totalorder %s25, 0
      %p204 = por %p202, %p203
      %p205 = scmp.le.s32.totalorder 1, %s19
      %p206 = scmp.lt.s32.totalorder %s19, 3
      %p207 = pnand %p205, %p206
      %p208 = pneg %p207
      // Predicated region
      $region9: #{ada_norm.1} parent=5 // pred_check
        _
      $region10: #{ada_norm.1} parent=5 // pred_check_branch
        %210 = sbr.rel (%p207) target = $region12
      $region11: #{ada_norm.1} parent=5 // pred_region
        %s211 = ssub.s32 %s19, 1
        // Predicated region
        $region13: #{ada_norm.1} parent=11 // pred_check
          %p212 = pneg %p106
        $region14: #{ada_norm.1} parent=11 // pred_check_branch
          %214 = sbr.rel (%p212) target = $region16
        $region15: #{ada_norm.1} parent=11 // pred_region
          %s216 = ssub.s32 1024, 1024
          %217 = vsyncadd [#allocation7], %s216
          %s218 = sshll.u32 [#allocation6], 4
          %s219 = int_to_ptr.vmem [resolvable:$true] %s218
          %224 = dma.hbm_to_vmem [thread:$0]  %s2, 1024, %s219, [#allocation7], 256, 256, 16
        $region16: #{ada_norm.1} parent=11 // pred_fallthru
          _
        // Predicated region
        $region17: #{ada_norm.1} parent=11 // pred_check
          %p225 = pneg %p127
        $region18: #{ada_norm.1} parent=11 // pred_check_branch
          %227 = sbr.rel (%p225) target = $region20
        $region19: #{ada_norm.1} parent=11 // pred_region
          _
        $region20: #{ada_norm.1} parent=11 // pred_fallthru
          _
        // Predicated region
        $region21: #{ada_norm.1} parent=11 // pred_check
          %p228 = pneg %p148
        $region22: #{ada_norm.1} parent=11 // pred_check_branch
          %230 = sbr.rel (%p228) target = $region24
        $region23: #{ada_norm.1} parent=11 // pred_region
          _
        $region24: #{ada_norm.1} parent=11 // pred_fallthru
          _
        // Predicated region
        $region25: #{ada_norm.1} parent=11 // pred_check
          %p231 = pneg %p169
        $region26: #{ada_norm.1} parent=11 // pred_check_branch
          %233 = sbr.rel (%p231) target = $region28
        $region27: #{ada_norm.1} parent=11 // pred_region
          _
        $region28: #{ada_norm.1} parent=11 // pred_fallthru
          _
      $region12: #{ada_norm.1} parent=5 // pred_fallthru
        _
      %p234 = scmp.lt.s32.totalorder %s19, 2
      // Predicated region
      $region29: #{ada_norm.1} parent=5 // pred_check
        %p235 = pneg %p234
      $region30: #{ada_norm.1} parent=5 // pred_check_branch
        %237 = sbr.rel (%p235) target = $region32
      $region31: #{ada_norm.1} parent=5 // pred_region
        // Predicated region
        $region33: #{ada_norm.1} parent=31 // pred_check
          %p238 = pneg %p53
        $region34: #{ada_norm.1} parent=31 // pred_check_branch
          %240 = sbr.rel (%p238) target = $region36
        $region35: #{ada_norm.1} parent=31 // pred_region
          %s241 = sand.u32 %s43, 1
          %s242 = scalar_lea.sflag [#allocation4], %s241
          %s243 = sand.u32 %s43, 1
          %s244 = smul.addr %s243, 8
          %s245 = scalar_lea.vmem [#allocation3], %s244
          %s247 = ssub.s32 128, 128
          %248 = vsyncadd %s242, %s247
          %s249 = sadd.s32 %s27, %s26
          %s250 = smul.addr %s249, 128
          %s251 = scalar_lea.hbm %s0, %s250
          %s253 = sshll.u32 %s245, 4
          %s254 = int_to_ptr.vmem [resolvable:$true] %s253
          %256 = dma.hbm_to_vmem [thread:$0]  %s251, 128, %s254, %s242
        $region36: #{ada_norm.1} parent=31 // pred_fallthru
          _
        // Predicated region
        $region37: #{ada_norm.1} parent=31 // pred_check
          %p257 = pneg %p79
        $region38: #{ada_norm.1} parent=31 // pred_check_branch
          %259 = sbr.rel (%p257) target = $region40
        $region39: #{ada_norm.1} parent=31 // pred_region
          %p260 = scmp.lt.s32.totalorder %s26, 1
          %s261 = scalar_select %p260, %s26, 1
          %s262 = scalar_lea.vmem %s1, %s261
        $region40: #{ada_norm.1} parent=31 // pred_fallthru
          _
      $region32: #{ada_norm.1} parent=5 // pred_fallthru
        _
      %p263 = scmp.le.s32.totalorder 1, %s19
      %p264 = scmp.lt.s32.totalorder %s19, 3
      %p265 = pnand %p263, %p264
      %p266 = pneg %p265
      // Predicated region
      $region41: #{ada_norm.1} parent=5 // pred_check
        _
      $region42: #{ada_norm.1} parent=5 // pred_check_branch
        %268 = sbr.rel (%p265) target = $region44
      $region43: #{ada_norm.1} parent=5 // pred_region
        %s269 = ssub.s32 %s19, 1
        %s270 = sand.u32 %s46, 1
        %s271 = scalar_lea.sflag [#allocation4], %s270
        %s272 = sand.u32 %s46, 1
        %s273 = smul.addr %s272, 8
        %s274 = scalar_lea.vmem [#allocation3], %s273
        // Predicated region
        $region45: #{ada_norm.1} parent=43 // pred_check
          %p275 = pneg %p59
        $region46: #{ada_norm.1} parent=43 // pred_check_branch
          %277 = sbr.rel (%p275) target = $region48
        $region47: #{ada_norm.1} parent=43 // pred_region
          %278 = dma.done %s271, 128
        $region48: #{ada_norm.1} parent=43 // pred_fallthru
          _
        // Predicated region
        $region49: #{ada_norm.1} parent=43 // pred_check
          %p279 = pneg %p106
        $region50: #{ada_norm.1} parent=43 // pred_check_branch
          %281 = sbr.rel (%p279) target = $region52
        $region51: #{ada_norm.1} parent=43 // pred_region
          %282 = dma.done [#allocation7], 1024
        $region52: #{ada_norm.1} parent=43 // pred_fallthru
          _
        %s283 = sand.u32 %s46, 1
        %s284 = scalar_lea.sflag [#allocation4], %s283
        %s285 = sand.u32 %s46, 1
        %s286 = smul.addr %s285, 8
        %s287 = scalar_lea.vmem [#allocation3], %s286
        %p288 = pneg %p59
        %p289 = pneg %p56
        %p290 = scmp.lt.s32.totalorder %s28, 1
        %s291 = scalar_select %p290, %s28, 1
        %s292 = scalar_lea.vmem %s1, %s291
        %p293 = pneg %p85
        %p294 = pneg %p82
        %p295 = pneg %p106
        %p296 = pneg %p103
        %p297 = pneg %p127
        %p298 = pneg %p124
        %p299 = pneg %p148
        %p300 = pneg %p145
        %p301 = pneg %p169
        %p302 = pneg %p166
        %p303 = pneg %p197
        %p304 = pneg %p194
        %s305 = sand.u32 %s184, 1
        %s306 = scalar_lea.sflag [#allocation5], %s305
        %s307 = sand.u32 %s184, 1
        %s308 = smul.addr %s307, 8
        %s309 = scalar_lea.vmem [#allocation8], %s308
        %p310 = scmp.lt.s32.totalorder %s28, 1
        %s311 = scalar_select %p310, %s28, 1
        %s312 = scalar_lea.vmem %s1, %s311
        %p313 = scmp.eq.s32.totalorder %s29, 0
        // Predicated region
        $region53: #{ada_norm.1} parent=43 // pred_check
          %p314 = pneg %p313
        $region54: #{ada_norm.1} parent=43 // pred_check_branch
          %316 = sbr.rel (%p314) target = $region56
        $region55: #{ada_norm.1} parent=43 // pred_region
          %v317 = vld [vmem:[%s312] sm:$0x1]
          %v318 = vxor.u32 %v317, 2147483648
          %v319 = vmul.f32 %v318, 1.442695
          %v320 = vpow.pop %v319
          %v321 = vadd.f32 %v320, 1.0
          %v322 = vrcp.pop %v321
          %v323 = vmul.f32 1.0, %v322
          %v324 = vmul.f32 %v317, %v323
          %v325 = vld [vmem:[#allocation6] sm:$0xff]
          %v326 = vld [vmem:[#allocation6 + $0x8] sm:$0xff]
          %v327 = vld [vmem:[#allocation6 + $0x10] sm:$0xff]
          %v328 = vld [vmem:[#allocation6 + $0x18] sm:$0xff]
          %v329 = vld [vmem:[#allocation6 + $0x20] sm:$0xff]
          %v330 = vld [vmem:[#allocation6 + $0x28] sm:$0xff]
          %v331 = vld [vmem:[#allocation6 + $0x30] sm:$0xff]
          %v332 = vld [vmem:[#allocation6 + $0x38] sm:$0xff]
          %v333 = vld [vmem:[%s3] sm:$0x3]
          %v335 = vlaneseq
          %v336 = vshrl.u32 %v335, 7
          %v337 = vsub.s32 0, %v336
          %v338 = vrot.slane %v333, %v337
          %v339 = vlaneseq
          %v340 = vshrl.u32 %v339, 7
          %v341 = vsub.s32 1, %v340
          %v342 = vrot.slane %v333, %v341
          %vm345 = vcmask 261120
          %v347 = vsel %vm345, %v324, 0
          %349 = vmatprep.subr.mxu0 0.0
          %350 = vmatpush1.msra.mxu0 0.0
          %351 = vmatprep.subr.mxu0 0.0
          %352 = vmatpush1.msra.mxu0 0.0
          %353 = vmatprep.subr.mxu0 0.0
          %354 = vmatpush1.msra.mxu0 0.0
          %355 = vmatprep.subr.mxu0 0.0
          %356 = vmatpush1.msra.mxu0 0.0
          %357 = vmatprep.subr.mxu0 0.0
          %358 = vmatpush1.msra.mxu0 0.0
          %359 = vmatprep.subr.mxu0 0.0
          %360 = vmatpush1.msra.mxu0 0.0
          %361 = vmatprep.subr.mxu0 0.0
          %362 = vmatpush1.msra.mxu0 0.0
          %363 = vmatprep.subr.mxu0 0.0
          %364 = vmatpush1.msra.mxu0 0.0
          %365 = vmatprep.subr.mxu0 0.0
          %366 = vmatpush1.msra.mxu0 0.0
          %367 = vmatprep.subr.mxu0 0.0
          %368 = vmatpush1.msra.mxu0 0.0
          %369 = vmatprep.subr.mxu0 0.0
          %370 = vmatpush1.msra.mxu0 0.0
          %371 = vmatprep.subr.mxu0 0.0
          %372 = vmatpush1.msra.mxu0 0.0
          %373 = vmatprep.subr.mxu0 %v332
          %374 = vmatpush1.msra.mxu0 %v331
          %375 = vmatprep.subr.mxu0 %v330
          %376 = vmatpush1.msra.mxu0 %v329
          %377 = vmatprep.subr.mxu0 %v328
          %378 = vmatpush1.msra.mxu0 %v327
          %379 = vmatprep.subr.mxu0 %v326
          %380 = vmatpush1.msra.mxu0 %v325
          %381 = vmatprep.subr.mxu0 0.0
          %382 = vmatpush2.msra.mxu0 0.0
          %383 = vmatprep.subr.mxu0 0.0
          %384 = vmatpush2.msra.mxu0 0.0
          %385 = vmatprep.subr.mxu0 0.0
          %386 = vmatpush2.msra.mxu0 0.0
          %387 = vmatprep.subr.mxu0 0.0
          %388 = vmatpush2.msra.mxu0 0.0
          %389 = vmatprep.subr.mxu0 0.0
          %390 = vmatpush2.msra.mxu0 0.0
          %391 = vmatprep.subr.mxu0 0.0
          %392 = vmatpush2.msra.mxu0 0.0
          %393 = vmatprep.subr.mxu0 0.0
          %394 = vmatpush2.msra.mxu0 0.0
          %395 = vmatprep.subr.mxu0 0.0
          %396 = vmatpush2.msra.mxu0 0.0
          %397 = vmatprep.subr.mxu0 0.0
          %398 = vmatpush2.msra.mxu0 0.0
          %399 = vmatprep.subr.mxu0 0.0
          %400 = vmatpush2.msra.mxu0 0.0
          %401 = vmatprep.subr.mxu0 0.0
          %402 = vmatpush2.msra.mxu0 0.0
          %403 = vmatprep.subr.mxu0 0.0
          %404 = vmatpush2.msra.mxu0 0.0
          %405 = vmatprep.subr.mxu0 0.0
          %406 = vmatpush2.msra.mxu0 0.0
          %407 = vmatprep.subr.mxu0 0.0
          %408 = vmatpush2.msra.mxu0 0.0
          %409 = vmatprep.subr.mxu0 0.0
          %410 = vmatpush2.msra.mxu0 0.0
          %411 = vmatprep.subr.mxu0 0.0
          %412 = vmatpush2.msra.mxu0 0.0
          %413 = vmatprep.mubr.f32.mxu0 0.0
          %414 = vmatmul.mubr.f32.gmra.mxu0 %v347
          %v415 = vpop.f32.mrf.mxu0
          %v416 = vadd.f32 %v338, %v415
          %v417 = vpop.f32.mrf.mxu0
          %v418 = vadd.f32 %v342, %v417
          %419 = vdwg.mxu0
          %v422 = vcombine.low %v416, %v418
          %v424 = vunpack.c.l.s4 1966171168
          %v425 = vunpack.c.0.s8 %v424
          %v426 = vlaneseq
          %v427 = vshrl.u32 %v426, 7
          %v428 = vsub.s32 %v425, %v427
          %v429 = vrot.slane %v422, %v428
          %v431 = vunpack.c.l.s4 1966171168
          %v432 = vunpack.c.0.s8 %v431
          %v433 = vlaneseq
          %v434 = vshrl.u32 %v433, 7
          %v435 = vsub.s32 %v432, %v434
          %v436 = vrot.slane %v429, %v435
          %v438 = vlaneseq
          %vm439 = vcmp.ge.s32.totalorder %v438, 0
          %vm440 = vcmp.lt.s32.totalorder %v438, 256
          %vm441 = vmand %vm439, %vm440
          %442 = vst.msk [vmem:[#allocation2] sm:$0x3] %vm441, %v436
        $region56: #{ada_norm.1} parent=43 // pred_fallthru
          _
        %v443 = vld [vmem:[#allocation2] sm:$0x3]
        %v445 = vrot.slane %v443, 1
        %v447 = vld [vmem:[%s274] sm:$0xff]
        %v448 = vmul.f32 %v447, %v447
        %449 = vadd.xlane.f32.xlu0 %v448
        %v450 = vpop.xlane.xlu0 %449
        %v451 = vrcp.pop 128.0
        %v452 = vmul.f32 %v450, %v451
        %v453 = vadd.f32 %v452, 1e-05
        %v454 = vrsqrt.pop %v453
        %v455 = vmul.f32 %v447, %v454
        %v456 = vld [vmem:[%s4] sm:$0x1]
        %v458 = vlaneseq
        %v459 = vshrl.u32 %v458, 7
        %v460 = vsub.s32 0, %v459
        %v461 = vrot.slane %v456, %v460
        %v463 = vmul.f32 %v461, %v455
        %v464 = vld [vmem:[%s5] sm:$0x1]
        %v466 = vlaneseq
        %v467 = vshrl.u32 %v466, 7
        %v468 = vsub.s32 0, %v467
        %v469 = vrot.slane %v464, %v468
        %v471 = vadd.f32 %v463, %v469
        %v472 = vadd.f32 %v445, 1.0
        %v474 = vlaneseq
        %v475 = vshrl.u32 %v474, 7
        %v476 = vsub.s32 0, %v475
        %v477 = vrot.slane %v472, %v476
        %v479 = vmul.f32 %v471, %v477
        %v480 = vlaneseq
        %v481 = vshrl.u32 %v480, 7
        %v482 = vsub.s32 0, %v481
        %v483 = vrot.slane %v443, %v482
        %v485 = vadd.f32 %v479, %v483
        %486 = vst [vmem:[%s309] sm:$0xff] %v485
        %s487 = sand.u32 %s184, 1
        %s488 = scalar_lea.sflag [#allocation5], %s487
        %s489 = sand.u32 %s184, 1
        %s490 = smul.addr %s489, 8
        %s491 = scalar_lea.vmem [#allocation8], %s490
        // Predicated region
        $region57: #{ada_norm.1} parent=43 // pred_check
          %p492 = pneg %p194
        $region58: #{ada_norm.1} parent=43 // pred_check_branch
          %494 = sbr.rel (%p492) target = $region60
        $region59: #{ada_norm.1} parent=43 // pred_region
          %s496 = ssub.s32 128, 128
          %497 = vsyncadd %s488, %s496
          %s498 = sadd.s32 %s29, %s28
          %s499 = smul.addr %s498, 128
          %s500 = scalar_lea.hbm %s6, %s499
          %s502 = sshll.u32 %s491, 4
          %s503 = int_to_ptr.vmem [resolvable:$true] %s502
          %505 = dma.vmem_to_hbm [thread:$0]  %s503, 128, %s500, %s488
        $region60: #{ada_norm.1} parent=43 // pred_fallthru
          _
      $region44: #{ada_norm.1} parent=5 // pred_fallthru
        _
      %p506 = scmp.le.s32.totalorder 2, %s19
      // Predicated region
      $region61: #{ada_norm.1} parent=5 // pred_check
        %p507 = pneg %p506
      $region62: #{ada_norm.1} parent=5 // pred_check_branch
        %509 = sbr.rel (%p507) target = $region64
      $region63: #{ada_norm.1} parent=5 // pred_region
        %s510 = ssub.s32 %s19, 2
        // Predicated region
        $region65: #{ada_norm.1} parent=63 // pred_check
          %p511 = pneg %p200
        $region66: #{ada_norm.1} parent=63 // pred_check_branch
          %513 = sbr.rel (%p511) target = $region68
        $region67: #{ada_norm.1} parent=63 // pred_region
          %s514 = sand.u32 %s185, 1
          %s515 = scalar_lea.sflag [#allocation5], %s514
          %s516 = sand.u32 %s185, 1
          %s517 = smul.addr %s516, 8
          %s518 = scalar_lea.vmem [#allocation8], %s517
          %519 = dma.done %s515, 128
        $region68: #{ada_norm.1} parent=63 // pred_fallthru
          _
      $region64: #{ada_norm.1} parent=5 // pred_fallthru
        _
    $region6: #{ada_norm.1} parent=1 // loop_footer
      %s23 = sadd.s32 1, %s19
    $region7: #{ada_norm.1} parent=1 // loop_footer_branch
      %18 = sbr.rel target = $region3
    $region8: #{ada_norm.1} parent=1 // loop_exit
      _
    %520 = vsyncpa [#allocation4], 1
    %s521 = scalar_lea.sflag [#allocation4], 1
    %522 = vsyncpa %s521, 1
    %523 = vsyncpa [#allocation7], 1
    %524 = vsyncpa [#allocation5], 1
    %s525 = scalar_lea.sflag [#allocation5], 1
    %526 = vsyncpa %s525, 1

</llo_original>
